<compile_context>
chip_gen: v5e
topology: v5e:2x2
jax: 0.10.0
libtpu: 0.0.40
codegen_flags: <defaults>
</compile_context>

<pallas_src>
import functools

import numpy as np
import jax
import jax.numpy as jnp
from jax import lax
from jax.experimental import pallas as pl
from jax.experimental.pallas import tpu as pltpu


# ----------------------------- config (small, synthetic) -----------------------------
BATCH = 2
SEQ_LEN = 16
VOCAB = 50
EMBED_DIM = 32
CNN_N_GRAM_LIST = (2, 3, 4)
CNN_OUTPUT_CHANNEL = 8
NUM_CLASSES = 4

LANE = 128                                   # TPU lane width
ROWS = BATCH * SEQ_LEN                       # flattened (b, t) rows = 32
MAX_N = max(CNN_N_GRAM_LIST)                 # max taps = 4
VOCAB_PAD = LANE                             # full-lane one-hot, clean bf16 tiles
FEAT_DIM = len(CNN_N_GRAM_LIST) * CNN_OUTPUT_CHANNEL   # 24


# ----------------------------------- Pallas kernel -----------------------------------
def _classifier_kernel(batch, seq_len,
                       ids_ref, wcomb_ref, keep_ref, wpred_ref, bias_ref, out_ref):
    """Fused gather+conv -> tap-align -> ReLU+mask -> max-over-time -> head -> softmax.

    ids_ref  : (B*S, 1)        int32  token ids (flattened rows)
    wcomb_ref: (128, 4*128)    bf16   wemb @ wcat  (gather+conv collapsed; conv bias folded in)
    keep_ref : (B*S, 128)      f32    0/1 validity mask (n-gram channel group x time)
    wpred_ref: (128, 128)      bf16   pred weight, lane/feature padded with zeros
    bias_ref : (1, 128)        f32    pred bias on lanes 0..NC-1, -1e30 on padded lanes
    out_ref  : (B, 128)        f32    softmax probs in lanes 0..NC-1, 0 elsewhere
    """
    rows = batch * seq_len
    vocab_pad = wcomb_ref.shape[0]
    max_n = wcomb_ref.shape[1] // LANE

    # 1) One-hot gather + ALL conv taps of ALL n-grams (+ conv biases): one MXU push.
    ids = ids_ref[...]                                                   # (rows, 1) i32
    vocab_iota = lax.broadcasted_iota(jnp.int32, (rows, vocab_pad), 1)
    onehot = (vocab_iota == ids).astype(jnp.bfloat16)                    # (rows, 128) full-lane
    y = jnp.dot(onehot, wcomb_ref[...],
                preferred_element_type=jnp.float32)                      # (rows, max_n*128)

    # 2) Tap alignment on the idle XLU:  acc[r, :] = sum_k y[r + k, k*128:(k+1)*128].
    #    roll(shift=rows-k) == roll(shift=-k): rows that wrap only land on time
    #    positions zeroed by keep_ref (k < n  =>  t >= S-k  is invalid for that n-gram).
    acc = y[:, 0:LANE]
    for k in range(1, max_n):
        acc = acc + pltpu.roll(y[:, k * LANE:(k + 1) * LANE], shift=rows - k, axis=0)

    # 3) ReLU, precomputed validity mask (0 is neutral for the max), max over time.
    act = jnp.maximum(acc, 0.0) * keep_ref[...]                          # (rows, 128)
    feat = jnp.max(act.reshape(batch, seq_len, LANE), axis=1)            # (batch, 128)

    # 4) Head matmul (bf16 operands, f32 acc) + bias row (padded lanes at -1e30),
    #    then an exact softmax (rows sum to 1); padded lanes exp to exactly 0.
    logits = jnp.dot(feat.astype(jnp.bfloat16), wpred_ref[...],
                     preferred_element_type=jnp.float32) + bias_ref[...]  # (batch, 128)
    m = jnp.max(logits, axis=-1, keepdims=True)
    e = jnp.exp(logits - m)
    out_ref[...] = e / jnp.sum(e, axis=-1, keepdims=True)


# ----------------------------------- packing (host-side, once) -----------------------------------
def _pack_params(word_embedding, conv_params, pred_w, pred_b):
    """Pre-pack parameters into 4 dense, lane-padded operands (done once; weights are static)."""
    e_dim = word_embedding.shape[1]
    c = CNN_OUTPUT_CHANNEL
    n_groups = len(conv_params)
    assert e_dim < LANE and n_groups * c < LANE          # lane 127 reserved as bias carrier
    assert NUM_CLASSES <= LANE and VOCAB <= VOCAB_PAD

    # Embedding, lane-padded to 128, constant-1 column at lane 127 (conv-bias carrier).
    wemb = np.zeros((VOCAB_PAD, LANE), np.float32)
    wemb[:VOCAB, :e_dim] = np.asarray(word_embedding, np.float32)
    wemb[:, LANE - 1] = 1.0

    # Conv tap weights: tap k -> lane group [k*128,(k+1)*128); n-gram g -> channels g*C..(g+1)*C.
    wcat = np.zeros((LANE, MAX_N * LANE), np.float32)
    for g, (w, b) in enumerate(conv_params):
        w = np.asarray(w, np.float32)
        n = int(w.shape[0])
        for k in range(n):
            wcat[:e_dim, k * LANE + g * c: k * LANE + (g + 1) * c] = w[k]
        # conv bias added exactly once (tap-0 group only) via the constant-1 lane of wemb
        wcat[LANE - 1, g * c:(g + 1) * c] = np.asarray(b, np.float32)

    # Collapse gather + conv: one combined weight for the single in-kernel MXU push.
    wcomb = wemb @ wcat                                                  # (VOCAB_PAD, MAX_N*128)

    # Validity mask in flattened-row layout (time x channel-group validity per n-gram).
    keep = np.zeros((SEQ_LEN, LANE), np.float32)
    for g, n in enumerate(CNN_N_GRAM_LIST):
        keep[:SEQ_LEN - n + 1, g * c:(g + 1) * c] = 1.0
    keep_rows = np.tile(keep, (BATCH, 1))                                # (ROWS, 128)

    # Pred head: (128,128), cols 0..NC-1 = W^T (feature rows 0..F-1), rest zero.
    wpred = np.zeros((LANE, LANE), np.float32)
    wpred[:FEAT_DIM, :NUM_CLASSES] = np.asarray(pred_w, np.float32).T
    # Bias row: pred bias on valid lanes, -1e30 on padded lanes (exp underflows to 0).
    bias = np.full((1, LANE), -1e30, np.float32)
    bias[0, :NUM_CLASSES] = np.asarray(pred_b, np.float32)

    return (jnp.asarray(wcomb, jnp.bfloat16),
            jnp.asarray(keep_rows, jnp.float32),
            jnp.asarray(wpred, jnp.bfloat16),
            jnp.asarray(bias, jnp.float32))


# ----------------------------------- wrapper -----------------------------------
def sentence_classifier_forward(inp, word_embedding, conv_params, pred_w, pred_b):
    """inp: (B, S) int32 token ids; returns (B, NUM_CLASSES) softmax probabilities."""
    # Tap-alignment wrap/cross-batch contamination is only masked correctly if every
    # n-gram fits in the sequence (mask applied AFTER ReLU covers all contaminated t).
    assert min(CNN_N_GRAM_LIST) >= 1 and max(CNN_N_GRAM_LIST) <= SEQ_LEN

    wcomb_p, keep_p, wpred_p, bias_p = _pack_params(word_embedding, conv_params, pred_w, pred_b)
    ids = inp.reshape(ROWS, 1).astype(jnp.int32)

    # Dropout: inference-mode identity.
    # TODO(synk): training-mode dropout RNG mask is intentionally not modeled.
    kernel = functools.partial(_classifier_kernel, BATCH, SEQ_LEN)

    flops = 2 * (ROWS * VOCAB_PAD * (MAX_N * LANE)       # fused gather+conv matmul
                 + BATCH * LANE * LANE)                  # pred head
    bytes_accessed = (ids.size * 4 + wcomb_p.size * 2 + keep_p.size * 4
                      + wpred_p.size * 2 + bias_p.size * 4 + BATCH * LANE * 4)

    vmem = pl.BlockSpec(memory_space=pltpu.MemorySpace.VMEM)
    out = pl.pallas_call(
        kernel,
        out_shape=jax.ShapeDtypeStruct((BATCH, LANE), jnp.float32),   # lane-dense store
        in_specs=[vmem, vmem, vmem, vmem, vmem],
        out_specs=vmem,
        cost_estimate=pl.CostEstimate(
            flops=flops,
            transcendentals=BATCH * LANE,
            bytes_accessed=bytes_accessed),
    )(ids, wcomb_p, keep_p, wpred_p, bias_p)
    return out[:, :NUM_CLASSES]


# ----------------------------------- reference (pure JAX, f32) -----------------------------------
def _reference_forward(inp, word_embedding, conv_params, pred_w, pred_b):
    emb = word_embedding[inp].astype(jnp.float32)
    feats = []
    for (w, b) in conv_params:
        n = w.shape[0]
        l_out = SEQ_LEN - n + 1
        acc = jnp.zeros((BATCH, l_out, CNN_OUTPUT_CHANNEL), jnp.float32)
        for k in range(n):
            acc = acc + jnp.einsum('ble,ec->blc', emb[:, k:k + l_out, :], w[k])
        act = jax.nn.relu(acc + b[None, None, :])
        feats.append(jnp.max(act, axis=1))
    feat = jnp.concatenate(feats, axis=-1)
    logits = feat @ pred_w.T + pred_b
    return jax.nn.softmax(logits, axis=-1)


# ----------------------------------- main -----------------------------------
if __name__ == "__main__":
    key = jax.random.PRNGKey(0)
    k_emb, k_inp, k_pred, *k_convs = jax.random.split(key, 3 + 2 * len(CNN_N_GRAM_LIST))

    word_embedding = jax.random.normal(k_emb, (VOCAB, EMBED_DIM), jnp.float32) * 0.1
    inp = jax.random.randint(k_inp, (BATCH, SEQ_LEN), 0, VOCAB, jnp.int32)

    conv_params = []
    for i, n in enumerate(CNN_N_GRAM_LIST):
        w = jax.random.normal(k_convs[2 * i], (n, EMBED_DIM, CNN_OUTPUT_CHANNEL), jnp.float32) * 0.1
        b = jax.random.normal(k_convs[2 * i + 1], (CNN_OUTPUT_CHANNEL,), jnp.float32) * 0.01
        conv_params.append((w, b))

    in_features = FEAT_DIM
    xavier_std = (2.0 / (in_features + NUM_CLASSES)) ** 0.5
    pred_w = jax.random.normal(k_pred, (NUM_CLASSES, in_features), jnp.float32) * xavier_std
    pred_b = jnp.zeros((NUM_CLASSES,), jnp.float32)

    out = sentence_classifier_forward(inp, word_embedding, conv_params, pred_w, pred_b)
    out = jax.block_until_ready(out)

    ref = _reference_forward(inp, word_embedding, conv_params, pred_w, pred_b)
    assert out.shape == (BATCH, NUM_CLASSES)
    # bf16 MXU operands => relaxed tolerance vs f32 reference.
    assert jnp.allclose(out, ref, atol=1e-2, rtol=1e-2), "kernel mismatch vs reference"
    # Exact divide in the softmax -> rows sum to 1 (up to f32 rounding).
    assert jnp.allclose(jnp.sum(out, axis=-1), 1.0, atol=1e-5), "softmax rows must sum to 1"

    print("KERNEL_OK")
</pallas_src>

<mosaic_0001>
module attributes {stable_mosaic.version = 11 : i64} {
  func.func @_classifier_kernel(%arg0: memref<32x1xi32, #tpu.memory_space<vmem>>, %arg1: memref<128x512xbf16, #tpu.memory_space<vmem>>, %arg2: memref<32x128xf32, #tpu.memory_space<vmem>>, %arg3: memref<128x128xbf16, #tpu.memory_space<vmem>>, %arg4: memref<1x128xf32, #tpu.memory_space<vmem>>, %arg5: memref<2x128xf32, #tpu.memory_space<vmem>>) attributes {dimension_semantics = [], scalar_prefetch = 0 : i64, scratch_operands = 0 : i64, tpu.core_type = #tpu.core_type<tc>} {
    %c0 = arith.constant 0 : index
    %c0_0 = arith.constant 0 : index
    %0 = vector.load %arg0[%c0, %c0_0] : memref<32x1xi32, #tpu.memory_space<vmem>>, vector<32x1xi32>
    %1 = tpu.iota {dimensions = array<i32: 1>} : vector<32x128xi32>
    %2 = vector.broadcast %0 : vector<32x1xi32> to vector<32x128xi32>
    %3 = arith.cmpi eq, %1, %2 : vector<32x128xi32>
    %4 = arith.extui %3 : vector<32x128xi1> to vector<32x128xi32>
    %5 = arith.sitofp %4 : vector<32x128xi32> to vector<32x128xf32>
    %6 = arith.truncf %5 : vector<32x128xf32> to vector<32x128xbf16>
    %c0_1 = arith.constant 0 : index
    %c0_2 = arith.constant 0 : index
    %7 = vector.load %arg1[%c0_1, %c0_2] : memref<128x512xbf16, #tpu.memory_space<vmem>>, vector<128x512xbf16>
    %cst = arith.constant dense<0.000000e+00> : vector<32x512xf32>
    %8 = tpu.matmul %6, %7, %cst {dimension_numbers = #tpu.dot_dimension_numbers<[1], [0], [0], [1], [0, 0, 1, 1], [], []>} : vector<32x128xbf16>, vector<128x512xbf16>, vector<32x512xf32> -> vector<32x512xf32>
    %9 = vector.extract_strided_slice %8 {offsets = [0, 0], sizes = [32, 128], strides = [1, 1]} : vector<32x512xf32> to vector<32x128xf32>
    %10 = vector.extract_strided_slice %8 {offsets = [0, 128], sizes = [32, 128], strides = [1, 1]} : vector<32x512xf32> to vector<32x128xf32>
    %c31_i32 = arith.constant 31 : i32
    %11 = tpu.dynamic_rotate %10 by %c31_i32 dim 0 : vector<32x128xf32>, i32 -> vector<32x128xf32>
    %12 = arith.addf %9, %11 : vector<32x128xf32>
    %13 = vector.extract_strided_slice %8 {offsets = [0, 256], sizes = [32, 128], strides = [1, 1]} : vector<32x512xf32> to vector<32x128xf32>
    %c30_i32 = arith.constant 30 : i32
    %14 = tpu.dynamic_rotate %13 by %c30_i32 dim 0 : vector<32x128xf32>, i32 -> vector<32x128xf32>
    %15 = arith.addf %12, %14 : vector<32x128xf32>
    %16 = vector.extract_strided_slice %8 {offsets = [0, 384], sizes = [32, 128], strides = [1, 1]} : vector<32x512xf32> to vector<32x128xf32>
    %c29_i32 = arith.constant 29 : i32
    %17 = tpu.dynamic_rotate %16 by %c29_i32 dim 0 : vector<32x128xf32>, i32 -> vector<32x128xf32>
    %18 = arith.addf %15, %17 : vector<32x128xf32>
    %cst_3 = arith.constant 0.000000e+00 : f32
    %19 = vector.broadcast %cst_3 : f32 to vector<32x128xf32>
    %20 = arith.maximumf %18, %19 : vector<32x128xf32>
    %c0_4 = arith.constant 0 : index
    %c0_5 = arith.constant 0 : index
    %21 = vector.load %arg2[%c0_4, %c0_5] : memref<32x128xf32, #tpu.memory_space<vmem>>, vector<32x128xf32>
    %22 = arith.mulf %20, %21 : vector<32x128xf32>
    %23 = vector.shape_cast %22 : vector<32x128xf32> to vector<2x16x128xf32>
    %cst_6 = arith.constant dense<0xFF800000> : vector<2x128xf32>
    %24 = vector.multi_reduction <maximumf>, %23, %cst_6 [1] : vector<2x16x128xf32> to vector<2x128xf32>
    %25 = arith.truncf %24 : vector<2x128xf32> to vector<2x128xbf16>
    %c0_7 = arith.constant 0 : index
    %c0_8 = arith.constant 0 : index
    %26 = vector.load %arg3[%c0_7, %c0_8] : memref<128x128xbf16, #tpu.memory_space<vmem>>, vector<128x128xbf16>
    %cst_9 = arith.constant dense<0.000000e+00> : vector<2x128xf32>
    %27 = tpu.matmul %25, %26, %cst_9 {dimension_numbers = #tpu.dot_dimension_numbers<[1], [0], [0], [1], [0, 0, 1, 1], [], []>} : vector<2x128xbf16>, vector<128x128xbf16>, vector<2x128xf32> -> vector<2x128xf32>
    %c0_10 = arith.constant 0 : index
    %c0_11 = arith.constant 0 : index
    %28 = vector.load %arg4[%c0_10, %c0_11] : memref<1x128xf32, #tpu.memory_space<vmem>>, vector<1x128xf32>
    %29 = vector.broadcast %28 : vector<1x128xf32> to vector<2x128xf32>
    %30 = arith.addf %27, %29 : vector<2x128xf32>
    %cst_12 = arith.constant dense<0xFF800000> : vector<2xf32>
    %31 = vector.multi_reduction <maximumf>, %30, %cst_12 [1] : vector<2x128xf32> to vector<2xf32>
    %32 = vector.shape_cast %31 : vector<2xf32> to vector<2x1xf32>
    %33 = vector.broadcast %32 : vector<2x1xf32> to vector<2x128xf32>
    %34 = arith.subf %30, %33 : vector<2x128xf32>
    %35 = math.exp %34 : vector<2x128xf32>
    %cst_13 = arith.constant dense<0.000000e+00> : vector<2xf32>
    %36 = vector.multi_reduction <add>, %35, %cst_13 [1] : vector<2x128xf32> to vector<2xf32>
    %37 = vector.shape_cast %36 : vector<2xf32> to vector<2x1xf32>
    %38 = vector.broadcast %37 : vector<2x1xf32> to vector<2x128xf32>
    %39 = arith.divf %35, %38 : vector<2x128xf32>
    %c0_14 = arith.constant 0 : index
    %c0_15 = arith.constant 0 : index
    %40 = vector.load %arg5[%c0_14, %c0_15] : memref<2x128xf32, #tpu.memory_space<vmem>>, vector<2x128xf32>
    tpu.vector_store %arg5[%c0_14, %c0_15], %39 {strides = array<i32>} : memref<2x128xf32, #tpu.memory_space<vmem>>, vector<2x128xf32>,
    return
  }
}

</mosaic_0001>

<llo_original>
// kernel: tpu_custom_call.1
$region0: #{tpu_custom_call.1}
  #allocation0 [shape = 'u32[]', space=smem, size = 0x4, offset = 0x4, fixed_abs, tag = 'smem constant byte address 0x4 - core index']
  #allocation1 [shape = 'u32[72,128]{1,0:T(1,128)}', space=vmem, size = 0x9000, scoped, tag = 'internal scratch']
  %s0 = inlined_call_operand.vmem [shape: s32[32,1], index: 0, kind: input, shape index: {}]
  %s1 = inlined_call_operand.hbm [shape: bf16[128,512], index: 1, kind: input, shape index: {}]
  %s2 = inlined_call_operand.vmem [shape: f32[32,128], index: 2, kind: input, shape index: {}]
  %s3 = inlined_call_operand.hbm [shape: bf16[128,128], index: 3, kind: input, shape index: {}]
  %s4 = inlined_call_operand.vmem [shape: f32[1,128], index: 4, kind: input, shape index: {}]
  %s5 = inlined_call_operand.hbm [shape: f32[2,128], index: 5, kind: output, shape index: {}]
  %s6 = sld [smem:[#allocation0]]
  $region38: #{tpu_custom_call.1} parent=0
    _
  %s8 = ssub.s32 1, %s6
  %s9 = scalar_select 0, %s8, %s6
  $region1: #{tpu_custom_call.1} parent=0
    #allocation2 [shape = 'u8[131072]{0}', space=vmem, size = 0x20000, scoped, tag = 'input window, operand 1, single buffered']
    #allocation3 [shape = 's32[1]{0}', space=sflag, size = 0x4, scoped, tag = 'scoped memory for tpu_custom_call.1']
    #allocation4 [shape = 's32[1]{0}', space=sflag, size = 0x4, scoped, tag = 'scoped memory for tpu_custom_call.1']
    #allocation5 [shape = 'u8[32768]{0}', space=vmem, size = 0x8000, scoped, tag = 'input window, operand 3, single buffered']
    #allocation6 [shape = 's32[1]{0}', space=sflag, size = 0x4, scoped, tag = 'scoped memory for tpu_custom_call.1']
    #allocation7 [shape = 'u8[1024]{0}', space=vmem, size = 0x400, scoped, tag = 'output window, operand 0, single buffered']
    %10 = vsyncpa [#allocation3], 0
    %11 = vsyncpa [#allocation6], 0
    %12 = vsyncpa [#allocation4], 0
    // Predicated region
    $region2: #{tpu_custom_call.1} parent=1 // pred_check
      _
    $region3: #{tpu_custom_call.1} parent=1 // pred_check_branch
      %14 = sbr.rel (0) target = $region5
    $region4: #{tpu_custom_call.1} parent=1 // pred_region
      _
    $region5: #{tpu_custom_call.1} parent=1 // pred_fallthru
      _
    // Predicated region
    $region6: #{tpu_custom_call.1} parent=1 // pred_check
      _
    $region7: #{tpu_custom_call.1} parent=1 // pred_check_branch
      %16 = sbr.rel (0) target = $region9
    $region8: #{tpu_custom_call.1} parent=1 // pred_region
      %18 = vsyncadd [#allocation3], 0
      %s19 = sshll.u32 %s1, 4
      %s20 = int_to_ptr.hbm [resolvable:$true] %s19
      %s21 = sshll.u32 [#allocation2], 4
      %s22 = int_to_ptr.vmem [resolvable:$true] %s21
      %27 = dma.hbm_to_vmem [thread:$0]  %s20, 4096, %s22, [#allocation3], 256, 256, 16
    $region9: #{tpu_custom_call.1} parent=1 // pred_fallthru
      _
    // Predicated region
    $region10: #{tpu_custom_call.1} parent=1 // pred_check
      _
    $region11: #{tpu_custom_call.1} parent=1 // pred_check_branch
      %29 = sbr.rel (0) target = $region13
    $region12: #{tpu_custom_call.1} parent=1 // pred_region
      _
    $region13: #{tpu_custom_call.1} parent=1 // pred_fallthru
      _
    // Predicated region
    $region14: #{tpu_custom_call.1} parent=1 // pred_check
      _
    $region15: #{tpu_custom_call.1} parent=1 // pred_check_branch
      %31 = sbr.rel (0) target = $region17
    $region16: #{tpu_custom_call.1} parent=1 // pred_region
      %33 = vsyncadd [#allocation6], 0
      %s34 = sshll.u32 %s3, 4
      %s35 = int_to_ptr.hbm [resolvable:$true] %s34
      %s36 = sshll.u32 [#allocation5], 4
      %s37 = int_to_ptr.vmem [resolvable:$true] %s36
      %42 = dma.hbm_to_vmem [thread:$0]  %s35, 1024, %s37, [#allocation6], 64, 64, 4
    $region17: #{tpu_custom_call.1} parent=1 // pred_fallthru
      _
    // Predicated region
    $region18: #{tpu_custom_call.1} parent=1 // pred_check
      _
    $region19: #{tpu_custom_call.1} parent=1 // pred_check_branch
      %44 = sbr.rel (0) target = $region21
    $region20: #{tpu_custom_call.1} parent=1 // pred_region
      _
    $region21: #{tpu_custom_call.1} parent=1 // pred_fallthru
      _
    // Predicated region
    $region22: #{tpu_custom_call.1} parent=1 // pred_check
      _
    $region23: #{tpu_custom_call.1} parent=1 // pred_check_branch
      %46 = sbr.rel (0) target = $region25
    $region24: #{tpu_custom_call.1} parent=1 // pred_region
      %48 = dma.done [#allocation3], 4096
    $region25: #{tpu_custom_call.1} parent=1 // pred_fallthru
      _
    // Predicated region
    $region26: #{tpu_custom_call.1} parent=1 // pred_check
      _
    $region27: #{tpu_custom_call.1} parent=1 // pred_check_branch
      %50 = sbr.rel (0) target = $region29
    $region28: #{tpu_custom_call.1} parent=1 // pred_region
      %52 = dma.done [#allocation6], 1024
    $region29: #{tpu_custom_call.1} parent=1 // pred_fallthru
      _
    %v53 = vld [vmem:[%s0] sm:$0xff]
    %v54 = vld [vmem:[%s0 + $0x8] sm:$0xff]
    %v55 = vld [vmem:[%s0 + $0x10] sm:$0xff]
    %v56 = vld [vmem:[%s0 + $0x18] sm:$0xff]
    %v57 = vlaneseq
    %v58 = vand.u32 %v57, 127
    %59 = vset.pattern.permute.xlu0 0
    %60 = vperm.xlu0 %59, %v53
    %v61 = vpop.permute.xlu0 %60
    %62 = vset.pattern.permute.xlu0 0
    %63 = vperm.xlu0 %62, %v54
    %v64 = vpop.permute.xlu0 %63
    %65 = vset.pattern.permute.xlu0 0
    %66 = vperm.xlu0 %65, %v55
    %v67 = vpop.permute.xlu0 %66
    %68 = vset.pattern.permute.xlu0 0
    %69 = vperm.xlu0 %68, %v56
    %v70 = vpop.permute.xlu0 %69
    %vm71 = vcmp.eq.s32.totalorder %v58, %v61
    %vm72 = vcmp.eq.s32.totalorder %v58, %v64
    %vm73 = vcmp.eq.s32.totalorder %v58, %v67
    %vm74 = vcmp.eq.s32.totalorder %v58, %v70
    %v75 = vsel %vm71, 1, 0
    %v76 = vsel %vm72, 1, 0
    %v77 = vsel %vm73, 1, 0
    %v78 = vsel %vm74, 1, 0
    %v79 = vcvt.s32.f32 %v75
    %v80 = vcvt.s32.f32 %v76
    %v81 = vcvt.s32.f32 %v77
    %v82 = vcvt.s32.f32 %v78
    %v83 = vpack.c.bf16 %v80, %v79
    %v84 = vpack.c.bf16 %v82, %v81
    %v85 = vld [vmem:[#allocation2] sm:$0xff]
    %v86 = vld [vmem:[#allocation2 + $0x8] sm:$0xff]
    %v87 = vld [vmem:[#allocation2 + $0x10] sm:$0xff]
    %v88 = vld [vmem:[#allocation2 + $0x18] sm:$0xff]
    %v89 = vld [vmem:[#allocation2 + $0x20] sm:$0xff]
    %v90 = vld [vmem:[#allocation2 + $0x28] sm:$0xff]
    %v91 = vld [vmem:[#allocation2 + $0x30] sm:$0xff]
    %v92 = vld [vmem:[#allocation2 + $0x38] sm:$0xff]
    %v93 = vld [vmem:[#allocation2 + $0x40] sm:$0xff]
    %v94 = vld [vmem:[#allocation2 + $0x48] sm:$0xff]
    %v95 = vld [vmem:[#allocation2 + $0x50] sm:$0xff]
    %v96 = vld [vmem:[#allocation2 + $0x58] sm:$0xff]
    %v97 = vld [vmem:[#allocation2 + $0x60] sm:$0xff]
    %v98 = vld [vmem:[#allocation2 + $0x68] sm:$0xff]
    %v99 = vld [vmem:[#allocation2 + $0x70] sm:$0xff]
    %v100 = vld [vmem:[#allocation2 + $0x78] sm:$0xff]
    %v101 = vld [vmem:[#allocation2 + $0x80] sm:$0xff]
    %v102 = vld [vmem:[#allocation2 + $0x88] sm:$0xff]
    %v103 = vld [vmem:[#allocation2 + $0x90] sm:$0xff]
    %v104 = vld [vmem:[#allocation2 + $0x98] sm:$0xff]
    %v105 = vld [vmem:[#allocation2 + $0xa0] sm:$0xff]
    %v106 = vld [vmem:[#allocation2 + $0xa8] sm:$0xff]
    %v107 = vld [vmem:[#allocation2 + $0xb0] sm:$0xff]
    %v108 = vld [vmem:[#allocation2 + $0xb8] sm:$0xff]
    %v109 = vld [vmem:[#allocation2 + $0xc0] sm:$0xff]
    %v110 = vld [vmem:[#allocation2 + $0xc8] sm:$0xff]
    %v111 = vld [vmem:[#allocation2 + $0xd0] sm:$0xff]
    %v112 = vld [vmem:[#allocation2 + $0xd8] sm:$0xff]
    %v113 = vld [vmem:[#allocation2 + $0xe0] sm:$0xff]
    %v114 = vld [vmem:[#allocation2 + $0xe8] sm:$0xff]
    %v115 = vld [vmem:[#allocation2 + $0xf0] sm:$0xff]
    %v116 = vld [vmem:[#allocation2 + $0xf8] sm:$0xff]
    %v149 = vunpack.c.l.b16 %v85
    %v150 = vunpack.c.h.b16 %v85
    %v151 = vunpack.c.l.b16 %v86
    %v152 = vunpack.c.h.b16 %v86
    %v153 = vunpack.c.l.b16 %v87
    %v154 = vunpack.c.h.b16 %v87
    %v155 = vunpack.c.l.b16 %v88
    %v156 = vunpack.c.h.b16 %v88
    %v157 = vunpack.c.l.b16 %v89
    %v158 = vunpack.c.h.b16 %v89
    %v159 = vunpack.c.l.b16 %v90
    %v160 = vunpack.c.h.b16 %v90
    %v161 = vunpack.c.l.b16 %v91
    %v162 = vunpack.c.h.b16 %v91
    %v163 = vunpack.c.l.b16 %v92
    %v164 = vunpack.c.h.b16 %v92
    %v165 = vunpack.c.l.b16 %v93
    %v166 = vunpack.c.h.b16 %v93
    %v167 = vunpack.c.l.b16 %v94
    %v168 = vunpack.c.h.b16 %v94
    %v169 = vunpack.c.l.b16 %v95
    %v170 = vunpack.c.h.b16 %v95
    %v171 = vunpack.c.l.b16 %v96
    %v172 = vunpack.c.h.b16 %v96
    %v173 = vunpack.c.l.b16 %v97
    %v174 = vunpack.c.h.b16 %v97
    %v175 = vunpack.c.l.b16 %v98
    %v176 = vunpack.c.h.b16 %v98
    %v177 = vunpack.c.l.b16 %v99
    %v178 = vunpack.c.h.b16 %v99
    %v179 = vunpack.c.l.b16 %v100
    %v180 = vunpack.c.h.b16 %v100
    %v181 = vunpack.c.l.b16 %v101
    %v182 = vunpack.c.h.b16 %v101
    %v183 = vunpack.c.l.b16 %v102
    %v184 = vunpack.c.h.b16 %v102
    %v185 = vunpack.c.l.b16 %v103
    %v186 = vunpack.c.h.b16 %v103
    %v187 = vunpack.c.l.b16 %v104
    %v188 = vunpack.c.h.b16 %v104
    %v189 = vunpack.c.l.b16 %v105
    %v190 = vunpack.c.h.b16 %v105
    %v191 = vunpack.c.l.b16 %v106
    %v192 = vunpack.c.h.b16 %v106
    %v193 = vunpack.c.l.b16 %v107
    %v194 = vunpack.c.h.b16 %v107
    %v195 = vunpack.c.l.b16 %v108
    %v196 = vunpack.c.h.b16 %v108
    %v197 = vunpack.c.l.b16 %v109
    %v198 = vunpack.c.h.b16 %v109
    %v199 = vunpack.c.l.b16 %v110
    %v200 = vunpack.c.h.b16 %v110
    %v201 = vunpack.c.l.b16 %v111
    %v202 = vunpack.c.h.b16 %v111
    %v203 = vunpack.c.l.b16 %v112
    %v204 = vunpack.c.h.b16 %v112
    %v205 = vunpack.c.l.b16 %v113
    %v206 = vunpack.c.h.b16 %v113
    %v207 = vunpack.c.l.b16 %v114
    %v208 = vunpack.c.h.b16 %v114
    %v209 = vunpack.c.l.b16 %v115
    %v210 = vunpack.c.h.b16 %v115
    %v211 = vunpack.c.l.b16 %v116
    %v212 = vunpack.c.h.b16 %v116
    %v213 = vpack.c.b16 %v153, %v149
    %v214 = vpack.c.b16 %v154, %v150
    %v215 = vpack.c.b16 %v155, %v151
    %v216 = vpack.c.b16 %v156, %v152
    %v217 = vpack.c.b16 %v161, %v157
    %v218 = vpack.c.b16 %v162, %v158
    %v219 = vpack.c.b16 %v163, %v159
    %v220 = vpack.c.b16 %v164, %v160
    %v221 = vpack.c.b16 %v169, %v165
    %v222 = vpack.c.b16 %v170, %v166
    %v223 = vpack.c.b16 %v171, %v167
    %v224 = vpack.c.b16 %v172, %v168
    %v225 = vpack.c.b16 %v177, %v173
    %v226 = vpack.c.b16 %v178, %v174
    %v227 = vpack.c.b16 %v179, %v175
    %v228 = vpack.c.b16 %v180, %v176
    %v229 = vpack.c.b16 %v185, %v181
    %v230 = vpack.c.b16 %v186, %v182
    %v231 = vpack.c.b16 %v187, %v183
    %v232 = vpack.c.b16 %v188, %v184
    %v233 = vpack.c.b16 %v193, %v189
    %v234 = vpack.c.b16 %v194, %v190
    %v235 = vpack.c.b16 %v195, %v191
    %v236 = vpack.c.b16 %v196, %v192
    %v237 = vpack.c.b16 %v201, %v197
    %v238 = vpack.c.b16 %v202, %v198
    %v239 = vpack.c.b16 %v203, %v199
    %v240 = vpack.c.b16 %v204, %v200
    %v241 = vpack.c.b16 %v209, %v205
    %v242 = vpack.c.b16 %v210, %v206
    %v243 = vpack.c.b16 %v211, %v207
    %v244 = vpack.c.b16 %v212, %v208
    %277 = vmatpush.bf16.msra.mxu0 %v241
    %278 = vmatpush.bf16.msra.mxu0 %v237
    %279 = vmatpush.bf16.msra.mxu0 %v233
    %280 = vmatpush.bf16.msra.mxu0 %v229
    %281 = vmatpush.bf16.msra.mxu0 %v225
    %282 = vmatpush.bf16.msra.mxu0 %v221
    %283 = vmatpush.bf16.msra.mxu0 %v217
    %284 = vmatpush.bf16.msra.mxu0 %v213
    %285 = vmatmul.bf16.gmra.mxu0 %v83
    %v286 = vpop.f32.mrf.mxu0
    %v287 = vadd.f32 0.0, %v286
    %v288 = vpop.f32.mrf.mxu0
    %v289 = vadd.f32 0.0, %v288
    %290 = vmatmul.bf16.gmra.mxu0 %v84
    %v291 = vpop.f32.mrf.mxu0
    %v292 = vadd.f32 0.0, %v291
    %v293 = vpop.f32.mrf.mxu0
    %v294 = vadd.f32 0.0, %v293
    %295 = vdwg.mxu0
    %296 = vmatpush.bf16.msra.mxu0 %v242
    %297 = vmatpush.bf16.msra.mxu0 %v238
    %298 = vmatpush.bf16.msra.mxu0 %v234
    %299 = vmatpush.bf16.msra.mxu0 %v230
    %300 = vmatpush.bf16.msra.mxu0 %v226
    %301 = vmatpush.bf16.msra.mxu0 %v222
    %302 = vmatpush.bf16.msra.mxu0 %v218
    %303 = vmatpush.bf16.msra.mxu0 %v214
    %304 = vmatmul.bf16.gmra.mxu0 %v83
    %v305 = vpop.f32.mrf.mxu0
    %v306 = vadd.f32 0.0, %v305
    %v307 = vpop.f32.mrf.mxu0
    %v308 = vadd.f32 0.0, %v307
    %309 = vmatmul.bf16.gmra.mxu0 %v84
    %v310 = vpop.f32.mrf.mxu0
    %v311 = vadd.f32 0.0, %v310
    %v312 = vpop.f32.mrf.mxu0
    %v313 = vadd.f32 0.0, %v312
    %314 = vdwg.mxu0
    %315 = vmatpush.bf16.msra.mxu0 %v243
    %316 = vmatpush.bf16.msra.mxu0 %v239
    %317 = vmatpush.bf16.msra.mxu0 %v235
    %318 = vmatpush.bf16.msra.mxu0 %v231
    %319 = vmatpush.bf16.msra.mxu0 %v227
    %320 = vmatpush.bf16.msra.mxu0 %v223
    %321 = vmatpush.bf16.msra.mxu0 %v219
    %322 = vmatpush.bf16.msra.mxu0 %v215
    %323 = vmatmul.bf16.gmra.mxu0 %v83
    %v324 = vpop.f32.mrf.mxu0
    %v325 = vadd.f32 0.0, %v324
    %v326 = vpop.f32.mrf.mxu0
    %v327 = vadd.f32 0.0, %v326
    %328 = vmatmul.bf16.gmra.mxu0 %v84
    %v329 = vpop.f32.mrf.mxu0
    %v330 = vadd.f32 0.0, %v329
    %v331 = vpop.f32.mrf.mxu0
    %v332 = vadd.f32 0.0, %v331
    %333 = vdwg.mxu0
    %334 = vmatpush.bf16.msra.mxu0 %v244
    %335 = vmatpush.bf16.msra.mxu0 %v240
    %336 = vmatpush.bf16.msra.mxu0 %v236
    %337 = vmatpush.bf16.msra.mxu0 %v232
    %338 = vmatpush.bf16.msra.mxu0 %v228
    %339 = vmatpush.bf16.msra.mxu0 %v224
    %340 = vmatpush.bf16.msra.mxu0 %v220
    %341 = vmatpush.bf16.msra.mxu0 %v216
    %342 = vmatmul.bf16.gmra.mxu0 %v83
    %v343 = vpop.f32.mrf.mxu0
    %v344 = vadd.f32 0.0, %v343
    %v345 = vpop.f32.mrf.mxu0
    %v346 = vadd.f32 0.0, %v345
    %347 = vmatmul.bf16.gmra.mxu0 %v84
    %v348 = vpop.f32.mrf.mxu0
    %v349 = vadd.f32 0.0, %v348
    %v350 = vpop.f32.mrf.mxu0
    %v351 = vadd.f32 0.0, %v350
    %352 = vdwg.mxu0
    %v353 = vrot.slane %v306, 1
    %v354 = vrot.slane %v308, 1
    %v355 = vrot.slane %v311, 1
    %v356 = vrot.slane %v313, 1
    %v357 = vlaneseq
    %v358 = vshrl.u32 %v357, 7
    %vm359 = vcmp.lt.s32.totalorder %v358, 7
    %v360 = vsel %vm359, %v355, %v356
    %v361 = vsel %vm359, %v354, %v355
    %v362 = vsel %vm359, %v353, %v354
    %v363 = vsel %vm359, %v356, %v353
    %v364 = vadd.f32 %v287, %v362
    %v365 = vadd.f32 %v289, %v361
    %v366 = vadd.f32 %v292, %v360
    %v367 = vadd.f32 %v294, %v363
    %v368 = vrot.slane %v325, 2
    %v369 = vrot.slane %v327, 2
    %v370 = vrot.slane %v330, 2
    %v371 = vrot.slane %v332, 2
    %vm372 = vcmp.lt.s32.totalorder %v358, 6
    %v373 = vsel %vm372, %v370, %v371
    %v374 = vsel %vm372, %v369, %v370
    %v375 = vsel %vm372, %v368, %v369
    %v376 = vsel %vm372, %v371, %v368
    %v377 = vadd.f32 %v364, %v375
    %v378 = vadd.f32 %v365, %v374
    %v379 = vadd.f32 %v366, %v373
    %v380 = vadd.f32 %v367, %v376
    %v381 = vrot.slane %v344, 3
    %v382 = vrot.slane %v346, 3
    %v383 = vrot.slane %v349, 3
    %v384 = vrot.slane %v351, 3
    %vm385 = vcmp.lt.s32.totalorder %v358, 5
    %v386 = vsel %vm385, %v383, %v384
    %v387 = vsel %vm385, %v382, %v383
    %v388 = vsel %vm385, %v381, %v382
    %v389 = vsel %vm385, %v384, %v381
    %v390 = vadd.f32 %v377, %v388
    %v391 = vadd.f32 %v378, %v387
    %v392 = vadd.f32 %v379, %v386
    %v393 = vadd.f32 %v380, %v389
    %v394 = vmax.f32 %v390, 0.0
    %v395 = vmax.f32 %v391, 0.0
    %v396 = vmax.f32 %v392, 0.0
    %v397 = vmax.f32 %v393, 0.0
    %v398 = vld [vmem:[%s2] sm:$0xff]
    %v399 = vld [vmem:[%s2 + $0x8] sm:$0xff]
    %v400 = vld [vmem:[%s2 + $0x10] sm:$0xff]
    %v401 = vld [vmem:[%s2 + $0x18] sm:$0xff]
    %v402 = vmul.f32 %v394, %v398
    %v403 = vmul.f32 %v395, %v399
    %v404 = vmul.f32 %v396, %v400
    %v405 = vmul.f32 %v397, %v401
    %v406 = vmax.f32 %v402, %v403
    %v407 = vrot.slane %v406, 4
    %v408 = vmax.f32 %v406, %v407
    %v409 = vrot.slane %v408, 2
    %v410 = vmax.f32 %v408, %v409
    %v411 = vrot.slane %v410, 1
    %v412 = vmax.f32 %v410, %v411
    %v413 = vmax.f32 %v404, %v405
    %v414 = vrot.slane %v413, 4
    %v415 = vmax.f32 %v413, %v414
    %v416 = vrot.slane %v415, 2
    %v417 = vmax.f32 %v415, %v416
    %v418 = vrot.slane %v417, 1
    %v419 = vmax.f32 %v417, %v418
    %v420 = vpack.c.bf16 %v412, %v412
    %v421 = vpack.c.bf16 %v419, %v419
    %v422 = vld [vmem:[#allocation5] sm:$0xf]
    %v423 = vld [vmem:[#allocation5 + $0x4] sm:$0xf]
    %v424 = vld [vmem:[#allocation5 + $0x8] sm:$0xf]
    %v425 = vld [vmem:[#allocation5 + $0xc] sm:$0xf]
    %v426 = vld [vmem:[#allocation5 + $0x10] sm:$0xf]
    %v427 = vld [vmem:[#allocation5 + $0x14] sm:$0xf]
    %v428 = vld [vmem:[#allocation5 + $0x18] sm:$0xf]
    %v429 = vld [vmem:[#allocation5 + $0x1c] sm:$0xf]
    %v430 = vld [vmem:[#allocation5 + $0x20] sm:$0xf]
    %v431 = vld [vmem:[#allocation5 + $0x24] sm:$0xf]
    %v432 = vld [vmem:[#allocation5 + $0x28] sm:$0xf]
    %v433 = vld [vmem:[#allocation5 + $0x2c] sm:$0xf]
    %v434 = vld [vmem:[#allocation5 + $0x30] sm:$0xf]
    %v435 = vld [vmem:[#allocation5 + $0x34] sm:$0xf]
    %v436 = vld [vmem:[#allocation5 + $0x38] sm:$0xf]
    %v437 = vld [vmem:[#allocation5 + $0x3c] sm:$0xf]
    %v438 = vld [vmem:[%s4] sm:$0x1]
    %v440 = vperm.slane %v438, 0
    %v444 = vunpack.c.l.b16 %v420
    %v445 = vunpack.c.l.b16 %v421
    %vm446 = vcmask 1041409
    %v447 = vsel %vm446, %v445, %v444
    %v448 = vpack.c.b16 %v447, %v447
    %v466 = vunpack.c.l.b16 %v422
    %v467 = vunpack.c.l.b16 %v423
    %v468 = vunpack.c.l.b16 %v424
    %v469 = vunpack.c.l.b16 %v425
    %v470 = vunpack.c.l.b16 %v426
    %v471 = vunpack.c.l.b16 %v427
    %v472 = vunpack.c.l.b16 %v428
    %v473 = vunpack.c.l.b16 %v429
    %v474 = vunpack.c.l.b16 %v430
    %v475 = vunpack.c.l.b16 %v431
    %v476 = vunpack.c.l.b16 %v432
    %v477 = vunpack.c.l.b16 %v433
    %v478 = vunpack.c.l.b16 %v434
    %v479 = vunpack.c.l.b16 %v435
    %v480 = vunpack.c.l.b16 %v436
    %v481 = vunpack.c.l.b16 %v437
    %v482 = vpack.c.b16 %v467, %v466
    %v483 = vpack.c.b16 %v469, %v468
    %v484 = vpack.c.b16 %v471, %v470
    %v485 = vpack.c.b16 %v473, %v472
    %v486 = vpack.c.b16 %v475, %v474
    %v487 = vpack.c.b16 %v477, %v476
    %v488 = vpack.c.b16 %v479, %v478
    %v489 = vpack.c.b16 %v481, %v480
    %498 = vmatpush.bf16.msra.mxu0 %v489
    %499 = vmatpush.bf16.msra.mxu0 %v488
    %500 = vmatpush.bf16.msra.mxu0 %v487
    %501 = vmatpush.bf16.msra.mxu0 %v486
    %502 = vmatpush.bf16.msra.mxu0 %v485
    %503 = vmatpush.bf16.msra.mxu0 %v484
    %504 = vmatpush.bf16.msra.mxu0 %v483
    %505 = vmatpush.bf16.msra.mxu0 %v482
    %506 = vmatmul.bf16.gmra.mxu0 %v448
    %v507 = vpop.f32.mrf.mxu0
    %v508 = vadd.f32 %v440, %v507
    %v509 = vpop.f32.mrf.mxu0
    %510 = vdwg.mxu0
    %vm511 = vcmask 1041408
    %v512 = vsel %vm511, %v508, -inf
    %513 = vmax.xlane.f32.xlu0 %v512
    %v514 = vpop.xlane.xlu0 %513
    %v515 = vsub.f32 %v508, %v514
    %v516 = vmul.f32 %v515, 1.442695
    %v517 = vpow.pop %v516
    %v518 = vsel %vm511, %v517, 0.0
    %519 = vadd.xlane.f32.xlu0 %v518
    %v520 = vpop.xlane.xlu0 %519
    %v521 = vrcp.pop %v520
    %v522 = vmul.f32 %v520, %v521
    %v523 = vsub.f32 1.0, %v522
    %v524 = vmul.f32 %v521, %v523
    %v525 = vadd.f32 %v521, %v524
    %vm526 = vweird.f32 %v520
    %vm527 = vweird.f32 %v521
    %vm528 = vmor %vm526, %vm527
    %v529 = vsel %vm528, %v521, %v525
    %v530 = vand.u32 2147483647, %v520
    %vm531 = vcmp.eq.f32.partialorder %v530, 8.507059e+37
    %v532 = vand.u32 %v520, 2147483648
    %v533 = vor.u32 1.1754944e-38, %v532
    %v534 = vsel %vm531, %v533, %v529
    %v535 = vmul.f32 %v517, %v534
    %536 = vst [vmem:[#allocation7] sm:$0x3] %v535
    // Predicated region
    $region30: #{tpu_custom_call.1} parent=1 // pred_check
      _
    $region31: #{tpu_custom_call.1} parent=1 // pred_check_branch
      %538 = sbr.rel (0) target = $region33
    $region32: #{tpu_custom_call.1} parent=1 // pred_region
      %540 = vsyncadd [#allocation4], 0
      %s542 = sshll.u32 [#allocation7], 4
      %s543 = int_to_ptr.vmem [resolvable:$true] %s542
      %s544 = sshll.u32 %s5, 4
      %s545 = int_to_ptr.hbm [resolvable:$true] %s544
      %547 = dma.vmem_to_hbm [thread:$0]  %s543, 32, %s545, [#allocation4]
    $region33: #{tpu_custom_call.1} parent=1 // pred_fallthru
      _
    // Predicated region
    $region34: #{tpu_custom_call.1} parent=1 // pred_check
      _
    $region35: #{tpu_custom_call.1} parent=1 // pred_check_branch
      %549 = sbr.rel (0) target = $region37
    $region36: #{tpu_custom_call.1} parent=1 // pred_region
      %551 = dma.done [#allocation4], 32
    $region37: #{tpu_custom_call.1} parent=1 // pred_fallthru
      _
    %552 = vsyncpa [#allocation3], 1
    %553 = vsyncpa [#allocation6], 1
    %554 = vsyncpa [#allocation4], 1

</llo_original>
